<compile_context>
chip_gen: v5e
topology: v5e:2x2
jax: 0.10.0
libtpu: 0.0.40
codegen_flags: <defaults>
</compile_context>

<pallas_src>
import functools

import jax
import jax.numpy as jnp
from jax.experimental import pallas as pl
from jax.experimental.pallas import tpu as pltpu


def _round_up(x, m):
    return (x + m - 1) // m * m


def _global_sum_pool_kernel(batch_ref, x_ref, out_ref, acc_ref, *,
                            num_graphs_padded, compute_dtype,
                            tile_n, n_total, mask_nodes):
    # Grid = (F tiles [parallel], node tiles [arbitrary]); reduction axis last.
    i = pl.program_id(1)

    @pl.when(i == 0)
    def _():
        acc_ref[...] = jnp.zeros_like(acc_ref)

    # batch_ref: (1, tile_n) int32 (lane-dense).  Build the one-hot membership
    # matrix directly in transposed form (B_pad, tile_n): no XLU transpose.
    b = batch_ref[...]                                                       # (1, tile_n)
    graph_ids = jax.lax.broadcasted_iota(jnp.int32, (num_graphs_padded, 1), 0)  # (B_pad, 1)
    onehot = (graph_ids == b).astype(compute_dtype)                          # (B_pad, tile_n)

    xv = x_ref[...]                                                          # (tile_n, tile_f)
    if mask_nodes:
        # Ragged last node tile: zero out-of-range rows so garbage (possibly
        # NaN) past N never contaminates the MXU accumulation.
        node_ids = (jax.lax.broadcasted_iota(jnp.int32, (tile_n, 1), 0)
                    + i * tile_n)
        xv = jnp.where(node_ids < n_total, xv, jnp.array(0, xv.dtype))

    # Segment-sum as an MXU matmul: (B_pad, tile_n) @ (tile_n, tile_f) -> f32.
    acc_ref[...] += jnp.dot(onehot, xv, preferred_element_type=jnp.float32)

    @pl.when(i == pl.num_programs(1) - 1)
    def _():
        out_ref[...] = acc_ref[...].astype(out_ref.dtype)


def global_sum_pool(x, batch, num_graphs, *, tile_n=1024, tile_f=512):
    """Equivalent of torch_geometric.nn.global_add_pool(x, batch)."""
    n, f = x.shape
    out_dtype = x.dtype

    # bf16 one-hot is exact (0/1) and runs the MXU at full rate; everything
    # else computes with f32 operands.  Accumulation is always f32.
    if x.dtype == jnp.bfloat16:
        compute_dtype = jnp.bfloat16
    else:
        compute_dtype = jnp.float32
        if x.dtype != jnp.float32:
            x = x.astype(jnp.float32)

    # ---- Node tiling ----
    # Small N: a single full-dimension block (no boundary, no masking).
    # Large N: 128-aligned tiles; ragged last tile masked in-kernel.
    tile_n = max(128, _round_up(tile_n, 128))
    if n <= tile_n:
        tile_n_eff = n
        mask_nodes = False
    else:
        tile_n_eff = tile_n
        mask_nodes = (n % tile_n_eff != 0)
    num_n_tiles = pl.cdiv(n, tile_n_eff)

    # ---- Feature tiling ----
    if f <= tile_f:
        tile_f_eff = f                                # single full-dim F block
    else:
        tile_f_eff = max(128, _round_up(tile_f, 128))
    num_f_tiles = pl.cdiv(f, tile_f_eff)

    b_pad = _round_up(max(int(num_graphs), 1), 8)     # full-sublane accumulator

    batch_row = batch.astype(jnp.int32).reshape(1, n)  # lane-dense ids, no copy

    grid = (num_f_tiles, num_n_tiles)

    # ---- VMEM budget (double-buffered inputs/outputs + f32 accumulator) ----
    x_itemsize = jnp.dtype(x.dtype).itemsize
    out_itemsize = jnp.dtype(out_dtype).itemsize
    vmem_est = (2 * tile_n_eff * tile_f_eff * x_itemsize
                + 2 * 8 * tile_n_eff * 4
                + 2 * b_pad * tile_f_eff * out_itemsize
                + b_pad * tile_f_eff * 4)
    vmem_limit = int(min(64 * 1024 * 1024, max(2 * vmem_est, 16 * 1024 * 1024)))

    cost = pl.CostEstimate(
        flops=2 * n * b_pad * f,
        transcendentals=0,
        bytes_accessed=(n * f * x_itemsize + n * 4 + b_pad * f * out_itemsize),
    )

    kernel = functools.partial(
        _global_sum_pool_kernel,
        num_graphs_padded=b_pad,
        compute_dtype=compute_dtype,
        tile_n=tile_n_eff,
        n_total=n,
        mask_nodes=mask_nodes,
    )

    out_padded = pl.pallas_call(
        kernel,
        out_shape=jax.ShapeDtypeStruct((b_pad, f), out_dtype),
        grid_spec=pltpu.PrefetchScalarGridSpec(
            num_scalar_prefetch=0,
            grid=grid,
            in_specs=[
                # Lane-dense batch ids: (1, tile_n) block of the (1, N) row.
                pl.BlockSpec((1, tile_n_eff), lambda j, i: (0, i)),
                # Node-feature tile.
                pl.BlockSpec((tile_n_eff, tile_f_eff), lambda j, i: (i, j)),
            ],
            # Output block index constant across the node axis -> resident acc.
            out_specs=pl.BlockSpec((b_pad, tile_f_eff), lambda j, i: (0, j)),
            scratch_shapes=[pltpu.VMEM((b_pad, tile_f_eff), jnp.float32)],
        ),
        compiler_params=pltpu.CompilerParams(
            dimension_semantics=("parallel", "arbitrary"),
            vmem_limit_bytes=vmem_limit,
        ),
        cost_estimate=cost,
    )(batch_row, x)

    return out_padded[:num_graphs, :]


if __name__ == "__main__":
    key = jax.random.PRNGKey(0)
    k1, k2, k3, k4, k5 = jax.random.split(key, 5)

    # Case 1: small f32 graph batch (matches the original demo shapes).
    num_nodes, num_features, num_graphs = 16, 32, 4
    x = jax.random.normal(k1, (num_nodes, num_features), dtype=jnp.float32)
    batch = jnp.repeat(jnp.arange(num_graphs, dtype=jnp.int32),
                       num_nodes // num_graphs)
    out = jax.block_until_ready(global_sum_pool(x, batch, num_graphs))
    ref = jax.ops.segment_sum(x, batch, num_segments=num_graphs)
    assert out.shape == (num_graphs, num_features)
    assert jnp.allclose(out, ref, atol=1e-4, rtol=1e-4)

    # Case 2: bf16 inputs with ragged N / F / B (full-dim single-tile path).
    n2, f2, g2 = 50, 20, 5
    x2 = jax.random.normal(k2, (n2, f2), dtype=jnp.float32).astype(jnp.bfloat16)
    batch2 = jnp.sort(jax.random.randint(k3, (n2,), 0, g2, dtype=jnp.int32))
    out2 = jax.block_until_ready(global_sum_pool(x2, batch2, g2))
    ref2 = jax.ops.segment_sum(x2.astype(jnp.float32), batch2, num_segments=g2)
    assert out2.shape == (g2, f2)
    assert jnp.allclose(out2.astype(jnp.float32), ref2, atol=5e-2, rtol=5e-2)

    # Case 3: multi-tile N and F with ragged last tiles (exercises the
    # boundary blocks + in-kernel row masking; no jnp.pad copies anywhere).
    n3, f3, g3 = 700, 200, 6
    x3 = jax.random.normal(k4, (n3, f3), dtype=jnp.float32)
    batch3 = jax.random.randint(k5, (n3,), 0, g3, dtype=jnp.int32)
    out3 = jax.block_until_ready(
        global_sum_pool(x3, batch3, g3, tile_n=256, tile_f=128))
    ref3 = jax.ops.segment_sum(x3, batch3, num_segments=g3)
    assert out3.shape == (g3, f3)
    assert jnp.allclose(out3, ref3, atol=1e-2, rtol=1e-2)

    print("KERNEL_OK")
</pallas_src>

<mosaic_0001>
module attributes {stable_mosaic.version = 11 : i64} {
  func.func @_global_sum_pool_kernel(%arg0: i32, %arg1: i32, %arg2: memref<1x16xi32, #tpu.memory_space<vmem>>, %arg3: memref<16x32xf32, #tpu.memory_space<vmem>>, %arg4: memref<8x32xf32, #tpu.memory_space<vmem>>, %arg5: memref<8x32xf32, #tpu.memory_space<vmem>>) attributes {dimension_semantics = [#tpu.dimension_semantics<parallel>, #tpu.dimension_semantics<arbitrary>], iteration_bounds = array<i64: 1, 1>, scalar_prefetch = 0 : i64, scratch_operands = 1 : i64, tpu.core_type = #tpu.core_type<tc>, window_params = [{transform_indices = @transform_0, window_bounds = array<i64: 1, 16>}, {transform_indices = @transform_1, window_bounds = array<i64: 16, 32>}, {transform_indices = @transform_2, window_bounds = array<i64: 8, 32>}]} {
    %c0_i32 = arith.constant 0 : i32
    %0 = arith.cmpi eq, %arg1, %c0_i32 : i32
    %1 = arith.extui %0 : i1 to i32
    %c0_i32_0 = arith.constant 0 : i32
    %2 = arith.cmpi ne, %1, %c0_i32_0 : i32
    scf.if %2 {
      %cst_10 = arith.constant 0.000000e+00 : f32
      %18 = vector.broadcast %cst_10 : f32 to vector<8x32xf32>
      %c0_11 = arith.constant 0 : index
      %c0_12 = arith.constant 0 : index
      %19 = vector.load %arg5[%c0_11, %c0_12] : memref<8x32xf32, #tpu.memory_space<vmem>>, vector<8x32xf32>
      tpu.vector_store %arg5[%c0_11, %c0_12], %18 {strides = array<i32>} : memref<8x32xf32, #tpu.memory_space<vmem>>, vector<8x32xf32>,
    } else {
    }
    %c0 = arith.constant 0 : index
    %c0_1 = arith.constant 0 : index
    %3 = vector.load %arg2[%c0, %c0_1] : memref<1x16xi32, #tpu.memory_space<vmem>>, vector<1x16xi32>
    %4 = tpu.iota {dimensions = array<i32: 0>} : vector<8x1xi32>
    %5 = vector.broadcast %4 : vector<8x1xi32> to vector<8x16xi32>
    %6 = vector.broadcast %3 : vector<1x16xi32> to vector<8x16xi32>
    %7 = arith.cmpi eq, %5, %6 : vector<8x16xi32>
    %8 = arith.extui %7 : vector<8x16xi1> to vector<8x16xi32>
    %9 = arith.sitofp %8 : vector<8x16xi32> to vector<8x16xf32>
    %c0_2 = arith.constant 0 : index
    %c0_3 = arith.constant 0 : index
    %10 = vector.load %arg3[%c0_2, %c0_3] : memref<16x32xf32, #tpu.memory_space<vmem>>, vector<16x32xf32>
    %c0_4 = arith.constant 0 : index
    %c0_5 = arith.constant 0 : index
    %11 = vector.load %arg5[%c0_4, %c0_5] : memref<8x32xf32, #tpu.memory_space<vmem>>, vector<8x32xf32>
    %cst = arith.constant dense<0.000000e+00> : vector<8x32xf32>
    %12 = tpu.matmul %9, %10, %cst {dimension_numbers = #tpu.dot_dimension_numbers<[1], [0], [0], [1], [0, 0, 1, 1], [], []>} : vector<8x16xf32>, vector<16x32xf32>, vector<8x32xf32> -> vector<8x32xf32>
    %13 = arith.addf %11, %12 : vector<8x32xf32>
    %c0_6 = arith.constant 0 : index
    %c0_7 = arith.constant 0 : index
    %14 = vector.load %arg5[%c0_6, %c0_7] : memref<8x32xf32, #tpu.memory_space<vmem>>, vector<8x32xf32>
    tpu.vector_store %arg5[%c0_6, %c0_7], %13 {strides = array<i32>} : memref<8x32xf32, #tpu.memory_space<vmem>>, vector<8x32xf32>,
    %c0_i32_8 = arith.constant 0 : i32
    %15 = arith.cmpi eq, %arg1, %c0_i32_8 : i32
    %16 = arith.extui %15 : i1 to i32
    %c0_i32_9 = arith.constant 0 : i32
    %17 = arith.cmpi ne, %16, %c0_i32_9 : i32
    scf.if %17 {
      %c0_10 = arith.constant 0 : index
      %c0_11 = arith.constant 0 : index
      %18 = vector.load %arg5[%c0_10, %c0_11] : memref<8x32xf32, #tpu.memory_space<vmem>>, vector<8x32xf32>
      %c0_12 = arith.constant 0 : index
      %c0_13 = arith.constant 0 : index
      %19 = vector.load %arg4[%c0_12, %c0_13] : memref<8x32xf32, #tpu.memory_space<vmem>>, vector<8x32xf32>
      tpu.vector_store %arg4[%c0_12, %c0_13], %18 {strides = array<i32>} : memref<8x32xf32, #tpu.memory_space<vmem>>, vector<8x32xf32>,
    } else {
    }
    return
  }
  func.func @transform_0(%arg0: i32, %arg1: i32) -> (i32, i32) {
    %c0_i32 = arith.constant 0 : i32
    %c0_i32_0 = arith.constant 0 : i32
    return %c0_i32, %arg1 : i32, i32
  }
  func.func @transform_1(%arg0: i32, %arg1: i32) -> (i32, i32) {
    %c0_i32 = arith.constant 0 : i32
    return %arg1, %arg0 : i32, i32
  }
  func.func @transform_2(%arg0: i32, %arg1: i32) -> (i32, i32) {
    %c0_i32 = arith.constant 0 : i32
    %c0_i32_0 = arith.constant 0 : i32
    return %c0_i32, %arg0 : i32, i32
  }
}

</mosaic_0001>

<llo_original>
// kernel: tpu_custom_call.1
$region0: #{tpu_custom_call.1}
  #allocation0 [shape = 'u32[]', space=smem, size = 0x4, offset = 0x4, fixed_abs, tag = 'smem constant byte address 0x4 - core index']
  #allocation1 [shape = 'u32[72,128]{1,0:T(1,128)}', space=vmem, size = 0x9000, scoped, tag = 'internal scratch']
  #allocation2 [shape = 'f32[8,32]{1,0:T(8,128)}', space=vmem, size = 0x1000, scoped, tag = 'scratch operand']
  %s0 = inlined_call_operand.hbm [shape: s32[1,16], index: 0, kind: input, shape index: {}]
  %s1 = inlined_call_operand.hbm [shape: f32[16,32], index: 1, kind: input, shape index: {}]
  %s2 = inlined_call_operand.hbm [shape: f32[8,32], index: 2, kind: output, shape index: {}]
  %s3 = sld [smem:[#allocation0]]
  $region34: #{tpu_custom_call.1} parent=0
    _
  %s5 = ssub.s32 1, %s3
  %s6 = scalar_select 0, %s5, %s3
  $region1: #{tpu_custom_call.1} parent=0
    #allocation3 [shape = 'u8[512]{0}', space=vmem, size = 0x400, scoped, tag = 'input window, operand 0, single buffered']
    #allocation4 [shape = 's32[1]{0}', space=sflag, size = 0x4, scoped, tag = 'scoped memory for tpu_custom_call.1']
    #allocation5 [shape = 's32[1]{0}', space=sflag, size = 0x4, scoped, tag = 'scoped memory for tpu_custom_call.1']
    #allocation6 [shape = 'u8[8192]{0}', space=vmem, size = 0x2000, scoped, tag = 'input window, operand 1, single buffered']
    #allocation7 [shape = 's32[1]{0}', space=sflag, size = 0x4, scoped, tag = 'scoped memory for tpu_custom_call.1']
    #allocation8 [shape = 'u8[4096]{0}', space=vmem, size = 0x1000, scoped, tag = 'output window, operand 0, single buffered']
    %7 = vsyncpa [#allocation4], 0
    %8 = vsyncpa [#allocation7], 0
    %9 = vsyncpa [#allocation5], 0
    // Predicated region
    $region2: #{tpu_custom_call.1} parent=1 // pred_check
      _
    $region3: #{tpu_custom_call.1} parent=1 // pred_check_branch
      %11 = sbr.rel (0) target = $region5
    $region4: #{tpu_custom_call.1} parent=1 // pred_region
      %13 = vsyncadd [#allocation4], 0
      %s15 = sshll.u32 %s0, 4
      %s16 = int_to_ptr.hbm [resolvable:$true] %s15
      %s17 = sshll.u32 [#allocation3], 4
      %s18 = int_to_ptr.vmem [resolvable:$true] %s17
      %20 = dma.hbm_to_vmem [thread:$0]  %s16, 16, %s18, [#allocation4]
    $region5: #{tpu_custom_call.1} parent=1 // pred_fallthru
      _
    // Predicated region
    $region6: #{tpu_custom_call.1} parent=1 // pred_check
      _
    $region7: #{tpu_custom_call.1} parent=1 // pred_check_branch
      %22 = sbr.rel (0) target = $region9
    $region8: #{tpu_custom_call.1} parent=1 // pred_region
      %24 = vsyncadd [#allocation7], 0
      %s25 = sshll.u32 %s1, 4
      %s26 = int_to_ptr.hbm [resolvable:$true] %s25
      %s27 = sshll.u32 [#allocation6], 4
      %s28 = int_to_ptr.vmem [resolvable:$true] %s27
      %33 = dma.hbm_to_vmem [thread:$0]  %s26, 256, %s28, [#allocation7], 128, 128, 8
    $region9: #{tpu_custom_call.1} parent=1 // pred_fallthru
      _
    // Predicated region
    $region10: #{tpu_custom_call.1} parent=1 // pred_check
      _
    $region11: #{tpu_custom_call.1} parent=1 // pred_check_branch
      %35 = sbr.rel (0) target = $region13
    $region12: #{tpu_custom_call.1} parent=1 // pred_region
      %37 = dma.done [#allocation4], 16
    $region13: #{tpu_custom_call.1} parent=1 // pred_fallthru
      _
    // Predicated region
    $region14: #{tpu_custom_call.1} parent=1 // pred_check
      _
    $region15: #{tpu_custom_call.1} parent=1 // pred_check_branch
      %39 = sbr.rel (0) target = $region17
    $region16: #{tpu_custom_call.1} parent=1 // pred_region
      %41 = dma.done [#allocation7], 256
    $region17: #{tpu_custom_call.1} parent=1 // pred_fallthru
      _
    %p42 = scmp.eq.s32.totalorder 0, 0
    // Predicated region
    $region18: #{tpu_custom_call.1} parent=1 // pred_check
      %p43 = pneg %p42
    $region19: #{tpu_custom_call.1} parent=1 // pred_check_branch
      %45 = sbr.rel (%p43) target = $region21
    $region20: #{tpu_custom_call.1} parent=1 // pred_region
      %vm46 = vcmask 261120
      %47 = vst.msk [vmem:[#allocation2] sm:$0xff] %vm46, 0.0
    $region21: #{tpu_custom_call.1} parent=1 // pred_fallthru
      _
    %v48 = vld [vmem:[#allocation3] sm:$0x1]
    %v49 = vlaneseq
    %v50 = vshrl.u32 %v49, 7
    %v51 = vperm.slane %v48, 0
    %vm52 = vcmp.eq.s32.totalorder %v50, %v51
    %v53 = vsel %vm52, 1, 0
    %v54 = vcvt.s32.f32 %v53
    %v55 = vld [vmem:[#allocation6] sm:$0xff]
    %v56 = vld [vmem:[#allocation6 + $0x8] sm:$0xff]
    %v57 = vld [vmem:[#allocation2] sm:$0xff]
    %vm58 = vcmask 130048
    %v60 = vsel %vm58, %v54, 0
    %62 = vmatpush.msra.mxu0 0.0
    %63 = vmatpush.msra.mxu0 0.0
    %64 = vmatpush.msra.mxu0 0.0
    %65 = vmatpush.msra.mxu0 0.0
    %66 = vmatpush.msra.mxu0 0.0
    %67 = vmatpush.msra.mxu0 0.0
    %68 = vmatpush.msra.mxu0 0.0
    %69 = vmatpush.msra.mxu0 0.0
    %70 = vmatpush.msra.mxu0 0.0
    %71 = vmatpush.msra.mxu0 0.0
    %72 = vmatpush.msra.mxu0 0.0
    %73 = vmatpush.msra.mxu0 0.0
    %74 = vmatpush.msra.mxu0 0.0
    %75 = vmatpush.msra.mxu0 0.0
    %76 = vmatpush.msra.mxu0 %v56
    %77 = vmatpush.msra.mxu0 %v55
    %78 = vmatmul.f32.gmra.mxu0 %v60
    %v79 = vpop.f32.mrf.mxu0
    %v80 = vadd.f32 0.0, %v79
    %81 = vdwg.mxu0
    %v82 = vadd.f32 %v57, %v80
    %vm83 = vcmask 261120
    %84 = vst.msk [vmem:[#allocation2] sm:$0xff] %vm83, %v82
    // Predicated region
    $region22: #{tpu_custom_call.1} parent=1 // pred_check
      %p85 = pneg %p42
    $region23: #{tpu_custom_call.1} parent=1 // pred_check_branch
      %87 = sbr.rel (%p85) target = $region25
    $region24: #{tpu_custom_call.1} parent=1 // pred_region
      %v88 = vld [vmem:[#allocation2] sm:$0xff]
      %89 = vst.msk [vmem:[#allocation8] sm:$0xff] %vm83, %v88
    $region25: #{tpu_custom_call.1} parent=1 // pred_fallthru
      _
    // Predicated region
    $region26: #{tpu_custom_call.1} parent=1 // pred_check
      _
    $region27: #{tpu_custom_call.1} parent=1 // pred_check_branch
      %91 = sbr.rel (0) target = $region29
    $region28: #{tpu_custom_call.1} parent=1 // pred_region
      %93 = vsyncadd [#allocation5], 0
      %s95 = sshll.u32 [#allocation8], 4
      %s96 = int_to_ptr.vmem [resolvable:$true] %s95
      %s97 = sshll.u32 %s2, 4
      %s98 = int_to_ptr.hbm [resolvable:$true] %s97
      %100 = dma.vmem_to_hbm [thread:$0]  %s96, 128, %s98, [#allocation5]
    $region29: #{tpu_custom_call.1} parent=1 // pred_fallthru
      _
    // Predicated region
    $region30: #{tpu_custom_call.1} parent=1 // pred_check
      _
    $region31: #{tpu_custom_call.1} parent=1 // pred_check_branch
      %102 = sbr.rel (0) target = $region33
    $region32: #{tpu_custom_call.1} parent=1 // pred_region
      %104 = dma.done [#allocation5], 128
    $region33: #{tpu_custom_call.1} parent=1 // pred_fallthru
      _
    %105 = vsyncpa [#allocation4], 1
    %106 = vsyncpa [#allocation7], 1
    %107 = vsyncpa [#allocation5], 1

</llo_original>
